<compile_context>
chip_gen: v6e
topology: v6e:2x2x1
jax: 0.10.0
libtpu: 0.0.40
codegen_flags: <defaults>
</compile_context>

<pallas_src>
import functools

import jax
import jax.numpy as jnp
from jax import lax
from jax.experimental import pallas as pl
from jax.experimental.pallas import tpu as pltpu


def _spoc_kernel(x_ref, pca_ref, out_ref, acc_ref, *, hw_total, t_hw):
    # x_ref:   (tB, C, tHW)  activations in native layout (native dtype)
    # pca_ref: (C, D)        whitened projection matrix (f32), fetched once
    # out_ref: (tB, D)       L2-normalized descriptors
    # acc_ref: (tB, C)       f32 running SPoC sums (persists across HW steps)
    h = pl.program_id(1)
    n_hw = pl.num_programs(1)

    @pl.when(h == 0)
    def _():
        acc_ref[...] = jnp.zeros_like(acc_ref)

    # Spatial (lane-axis) partial sum, accumulated in f32 across HW grid steps.
    x = x_ref[...].astype(jnp.float32)                    # (tB, C, tHW)

    if hw_total % t_hw != 0:
        # Tail handling off the hot path: full tiles take the unmasked reduce;
        # only the final (partial) spatial tile pays for iota/compare/where.
        @pl.when(h < n_hw - 1)
        def _():
            acc_ref[...] += jnp.sum(x, axis=-1)

        @pl.when(h == n_hw - 1)
        def _():
            pos = h * t_hw + lax.broadcasted_iota(jnp.int32, x.shape, 2)
            acc_ref[...] += jnp.sum(jnp.where(pos < hw_total, x, 0.0), axis=-1)
    else:
        acc_ref[...] += jnp.sum(x, axis=-1)

    @pl.when(h == n_hw - 1)
    def _():
        s = acc_ref[...]                                           # (tB, C)
        inv1 = lax.rsqrt(jnp.sum(s * s, axis=-1, keepdims=True))   # EUP rsqrt
        s = s * inv1
        # PCA projection on the MXU (singular-value whitening folded into pca).
        p = jnp.dot(s, pca_ref[...], preferred_element_type=jnp.float32)
        inv2 = lax.rsqrt(jnp.sum(p * p, axis=-1, keepdims=True))
        out_ref[...] = (p * inv2).astype(out_ref.dtype)


def _pick_tiles(B, C, HW, D, itemsize):
    """Choose (t_b, t_hw, vmem_limit_bytes) from the device's VMEM capacity."""
    try:
        phys_vmem = int(pltpu.get_tpu_info().vmem_capacity_bytes)
    except Exception:
        phys_vmem = 64 << 20                       # conservative (v7x-sized)
    try:
        kind = jax.devices()[0].device_kind.lower()
    except Exception:
        kind = ""
    # v5e / v6e have a single TensorCore per device; v4/v5p (megacore) and v7x
    # have two, so make sure the "parallel" batch axis gets >= 2 tiles there.
    single_tc = ("lite" in kind) or ("v5e" in kind) or ("v6e" in kind)

    # Scoped-VMEM limit: ~48 MiB on 64-MiB parts (v7x), 64 MiB on 128-MiB parts.
    base_limit = (48 << 20) if phys_vmem <= (64 << 20) else (64 << 20)
    base_limit = min(base_limit, max(16 << 20, phys_vmem - (16 << 20)))

    # Per-step in-flight bytes ~= 2x native block (double buffer) + the f32
    # widen/reduce temporary materialized inside the kernel.
    inflight_factor = 2.0 + 4.0 / itemsize
    fixed_guess = 2 * C * D * 4 + (2 << 20)        # resident PCA buffers + slack
    block_budget = max(1 << 20,
                       int((base_limit * 3 // 4 - fixed_guess) / inflight_factor))

    # ---- spatial tile (lane axis: full HW or a multiple of 128) ----
    t_b_min = B if B < 8 else 8
    if HW <= 128 or t_b_min * C * HW * itemsize <= block_budget:
        t_hw = HW
    else:
        max_thw = (block_budget // max(1, t_b_min * C * itemsize)) // 128 * 128
        max_thw = int(max(128, min(max_thw, HW)))
        if max_thw >= HW:
            t_hw = HW
        else:
            t_hw = max_thw
            for cand in range(max_thw, 127, -128):  # prefer a divisor: no tail mask
                if HW % cand == 0:
                    t_hw = cand
                    break

    # ---- batch tile ----
    slab = max(1, C * t_hw * itemsize)              # bytes per batch row per step
    t_b = int(min(B, max(t_b_min, block_budget // slab)))
    if t_b < B:
        t_b = B if B < 8 else max(8, (t_b // 8) * 8)  # (tB, D) out block: mult-of-8 rows
    if (not single_tc) and B >= 16 and t_b >= B:
        t_b = ((-(-B // 2)) + 7) // 8 * 8           # >= 2 batch tiles -> both cores busy

    # ---- final scoped-VMEM request ----
    block_bytes = t_b * C * t_hw * itemsize
    fixed = 2 * C * D * 4 + t_b * C * 4 + 2 * t_b * D * 4
    needed = int(block_bytes * inflight_factor) + fixed + (2 << 20)
    vmem_limit = max(base_limit, min(needed, max(16 << 20, phys_vmem - (8 << 20))))
    return t_b, t_hw, int(vmem_limit)


def spoc_forward(x_nchw, pca_matrix, singular_values):
    """x_nchw: (B, C, H, W); pca_matrix: (C, D); singular_values: (D,)."""
    B, C, H, W = x_nchw.shape
    HW = H * W
    D = pca_matrix.shape[1]

    # Native layout: just flatten the spatial dims (free reshape, no relayout /
    # extra HBM pass).  Input dtype is preserved; accumulation is f32 in-kernel.
    x_flat = x_nchw.reshape(B, C, HW)

    # Fold the singular-value whitening into the projection matrix.
    pca_w = (pca_matrix.astype(jnp.float32)
             / singular_values.astype(jnp.float32)[None, :])

    itemsize = jnp.dtype(x_flat.dtype).itemsize
    t_b, t_hw, vmem_limit = _pick_tiles(B, C, HW, D, itemsize)

    grid = (pl.cdiv(B, t_b), pl.cdiv(HW, t_hw))
    kernel = functools.partial(_spoc_kernel, hw_total=HW, t_hw=t_hw)

    return pl.pallas_call(
        kernel,
        out_shape=jax.ShapeDtypeStruct((B, D), jnp.float32),
        grid_spec=pltpu.PrefetchScalarGridSpec(
            num_scalar_prefetch=0,
            grid=grid,
            in_specs=[
                pl.BlockSpec((t_b, C, t_hw), lambda b, h: (b, 0, h)),
                # Constant block index -> the pipeline fetches it once and keeps
                # it resident; its (small) spare pipeline buffer is accounted
                # for in the VMEM budget above.
                pl.BlockSpec((C, D), lambda b, h: (0, 0)),
            ],
            out_specs=pl.BlockSpec((t_b, D), lambda b, h: (b, 0)),
            scratch_shapes=[pltpu.VMEM((t_b, C), jnp.float32)],
        ),
        compiler_params=pltpu.CompilerParams(
            dimension_semantics=("parallel", "arbitrary"),
            vmem_limit_bytes=vmem_limit,
        ),
    )(x_flat, pca_w)


def spoc_reference(x_nchw, pca_matrix, singular_values):
    s = jnp.sum(x_nchw.astype(jnp.float32), axis=(2, 3))
    s = s / jnp.linalg.norm(s, axis=-1, keepdims=True)
    p = (s @ pca_matrix) / singular_values
    return p / jnp.linalg.norm(p, axis=-1, keepdims=True)


if __name__ == "__main__":
    key = jax.random.PRNGKey(0)
    k_x, k_pca, k_sv = jax.random.split(key, 3)

    B, C, H, W = 2, 4, 16, 16       # NCHW conv feature maps
    D = 32                          # desired_dimension

    x = jax.random.normal(k_x, (B, C, H, W), dtype=jnp.float32)
    pca_matrix = jax.random.normal(k_pca, (C, D), dtype=jnp.float32) * 0.1
    singular_values = jax.random.uniform(
        k_sv, (D,), dtype=jnp.float32, minval=0.5, maxval=1.5)

    out = spoc_forward(x, pca_matrix, singular_values)
    out = jax.block_until_ready(out)

    ref = spoc_reference(x, pca_matrix, singular_values)
    assert out.shape == (B, D)
    assert jnp.allclose(out, ref, atol=1e-5, rtol=1e-5)

    print("KERNEL_OK")
</pallas_src>

<mosaic_0001>
module attributes {stable_mosaic.version = 11 : i64} {
  func.func @_spoc_kernel(%arg0: i32, %arg1: i32, %arg2: memref<2x4x256xf32, #tpu.memory_space<vmem>>, %arg3: memref<4x32xf32, #tpu.memory_space<vmem>>, %arg4: memref<2x32xf32, #tpu.memory_space<vmem>>, %arg5: memref<2x4xf32, #tpu.memory_space<vmem>>) attributes {dimension_semantics = [#tpu.dimension_semantics<parallel>, #tpu.dimension_semantics<arbitrary>], iteration_bounds = array<i64: 1, 1>, scalar_prefetch = 0 : i64, scratch_operands = 1 : i64, tpu.core_type = #tpu.core_type<tc>, window_params = [{transform_indices = @transform_0, window_bounds = array<i64: 2, 4, 256>}, {pipeline_mode = #tpu.pipeline_mode<synchronous>, transform_indices = @transform_1, window_bounds = array<i64: 4, 32>}, {transform_indices = @transform_2, window_bounds = array<i64: 2, 32>}]} {
    %c0_i32 = arith.constant 0 : i32
    %0 = arith.cmpi eq, %arg1, %c0_i32 : i32
    %1 = arith.extui %0 : i1 to i32
    %c0_i32_0 = arith.constant 0 : i32
    %2 = arith.cmpi ne, %1, %c0_i32_0 : i32
    scf.if %2 {
      %cst_9 = arith.constant 0.000000e+00 : f32
      %11 = vector.broadcast %cst_9 : f32 to vector<2x4xf32>
      %c0_10 = arith.constant 0 : index
      %c0_11 = arith.constant 0 : index
      %12 = vector.load %arg5[%c0_10, %c0_11] : memref<2x4xf32, #tpu.memory_space<vmem>>, vector<2x4xf32>
      tpu.vector_store %arg5[%c0_10, %c0_11], %11 {strides = array<i32>} : memref<2x4xf32, #tpu.memory_space<vmem>>, vector<2x4xf32>,
    } else {
    }
    %c0 = arith.constant 0 : index
    %c0_1 = arith.constant 0 : index
    %c0_2 = arith.constant 0 : index
    %3 = vector.load %arg2[%c0, %c0_1, %c0_2] : memref<2x4x256xf32, #tpu.memory_space<vmem>>, vector<2x4x256xf32>
    %c0_3 = arith.constant 0 : index
    %c0_4 = arith.constant 0 : index
    %4 = vector.load %arg5[%c0_3, %c0_4] : memref<2x4xf32, #tpu.memory_space<vmem>>, vector<2x4xf32>
    %cst = arith.constant dense<0.000000e+00> : vector<2x4xf32>
    %5 = vector.multi_reduction <add>, %3, %cst [2] : vector<2x4x256xf32> to vector<2x4xf32>
    %6 = arith.addf %4, %5 : vector<2x4xf32>
    %c0_5 = arith.constant 0 : index
    %c0_6 = arith.constant 0 : index
    %7 = vector.load %arg5[%c0_5, %c0_6] : memref<2x4xf32, #tpu.memory_space<vmem>>, vector<2x4xf32>
    tpu.vector_store %arg5[%c0_5, %c0_6], %6 {strides = array<i32>} : memref<2x4xf32, #tpu.memory_space<vmem>>, vector<2x4xf32>,
    %c0_i32_7 = arith.constant 0 : i32
    %8 = arith.cmpi eq, %arg1, %c0_i32_7 : i32
    %9 = arith.extui %8 : i1 to i32
    %c0_i32_8 = arith.constant 0 : i32
    %10 = arith.cmpi ne, %9, %c0_i32_8 : i32
    scf.if %10 {
      %c0_9 = arith.constant 0 : index
      %c0_10 = arith.constant 0 : index
      %11 = vector.load %arg5[%c0_9, %c0_10] : memref<2x4xf32, #tpu.memory_space<vmem>>, vector<2x4xf32>
      %12 = arith.mulf %11, %11 : vector<2x4xf32>
      %cst_11 = arith.constant dense<0.000000e+00> : vector<2xf32>
      %13 = vector.multi_reduction <add>, %12, %cst_11 [1] : vector<2x4xf32> to vector<2xf32>
      %14 = vector.shape_cast %13 : vector<2xf32> to vector<2x1xf32>
      %15 = math.rsqrt %14 : vector<2x1xf32>
      %16 = vector.broadcast %15 : vector<2x1xf32> to vector<2x4xf32>
      %17 = arith.mulf %11, %16 : vector<2x4xf32>
      %c0_12 = arith.constant 0 : index
      %c0_13 = arith.constant 0 : index
      %18 = vector.load %arg3[%c0_12, %c0_13] : memref<4x32xf32, #tpu.memory_space<vmem>>, vector<4x32xf32>
      %cst_14 = arith.constant dense<0.000000e+00> : vector<2x32xf32>
      %19 = tpu.matmul %17, %18, %cst_14 {dimension_numbers = #tpu.dot_dimension_numbers<[1], [0], [0], [1], [0, 0, 1, 1], [], []>} : vector<2x4xf32>, vector<4x32xf32>, vector<2x32xf32> -> vector<2x32xf32>
      %20 = arith.mulf %19, %19 : vector<2x32xf32>
      %cst_15 = arith.constant dense<0.000000e+00> : vector<2xf32>
      %21 = vector.multi_reduction <add>, %20, %cst_15 [1] : vector<2x32xf32> to vector<2xf32>
      %22 = vector.shape_cast %21 : vector<2xf32> to vector<2x1xf32>
      %23 = math.rsqrt %22 : vector<2x1xf32>
      %24 = vector.broadcast %23 : vector<2x1xf32> to vector<2x32xf32>
      %25 = arith.mulf %19, %24 : vector<2x32xf32>
      %c0_16 = arith.constant 0 : index
      %c0_17 = arith.constant 0 : index
      %26 = vector.load %arg4[%c0_16, %c0_17] : memref<2x32xf32, #tpu.memory_space<vmem>>, vector<2x32xf32>
      tpu.vector_store %arg4[%c0_16, %c0_17], %25 {strides = array<i32>} : memref<2x32xf32, #tpu.memory_space<vmem>>, vector<2x32xf32>,
    } else {
    }
    return
  }
  func.func @transform_0(%arg0: i32, %arg1: i32) -> (i32, i32, i32) {
    %c0_i32 = arith.constant 0 : i32
    %c0_i32_0 = arith.constant 0 : i32
    return %arg0, %c0_i32, %arg1 : i32, i32, i32
  }
  func.func @transform_1(%arg0: i32, %arg1: i32) -> (i32, i32) {
    %c0_i32 = arith.constant 0 : i32
    %c0_i32_0 = arith.constant 0 : i32
    %c0_i32_1 = arith.constant 0 : i32
    return %c0_i32, %c0_i32_0 : i32, i32
  }
  func.func @transform_2(%arg0: i32, %arg1: i32) -> (i32, i32) {
    %c0_i32 = arith.constant 0 : i32
    %c0_i32_0 = arith.constant 0 : i32
    return %arg0, %c0_i32 : i32, i32
  }
}

</mosaic_0001>

<llo_original>
// kernel: tpu_custom_call.1
$region0: #{tpu_custom_call.1}
  #allocation0 [shape = 'u32[]', space=smem, size = 0x4, offset = 0x4, fixed_abs, tag = 'smem constant byte address 0x4 - core index']
  #allocation1 [shape = 'u32[144,128]{1,0:T(1,128)}', space=vmem, size = 0x12000, scoped, tag = 'internal scratch']
  #allocation2 [shape = 'f32[2,4]{1,0:T(2,128)}', space=vmem, size = 0x400, scoped, tag = 'scratch operand']
  %s0 = inlined_call_operand.hbm [shape: f32[2,4,256], index: 0, kind: input, shape index: {}]
  %s1 = inlined_call_operand.hbm [shape: f32[4,32], index: 1, kind: input, shape index: {}]
  %s2 = inlined_call_operand.hbm [shape: f32[2,32], index: 2, kind: output, shape index: {}]
  %s3 = sld [smem:[#allocation0]]
  $region34: #{tpu_custom_call.1} parent=0
    _
  %s5 = ssub.s32 1, %s3
  %s6 = scalar_select 0, %s5, %s3
  $region1: #{tpu_custom_call.1} parent=0
    #allocation3 [shape = 'u8[8192]{0}', space=vmem, size = 0x2000, scoped, tag = 'input window, operand 0, single buffered']
    #allocation4 [shape = 's32[1]{0}', space=sflag, size = 0x4, scoped, tag = 'scoped memory for tpu_custom_call.1']
    #allocation5 [shape = 's32[1]{0}', space=sflag, size = 0x4, scoped, tag = 'scoped memory for tpu_custom_call.1']
    #allocation6 [shape = 'u8[2048]{0}', space=vmem, size = 0x800, scoped, tag = 'input window, operand 1, single buffered']
    #allocation7 [shape = 's32[1]{0}', space=sflag, size = 0x4, scoped, tag = 'scoped memory for tpu_custom_call.1']
    #allocation8 [shape = 'u8[1024]{0}', space=vmem, size = 0x400, scoped, tag = 'output window, operand 0, single buffered']
    %7 = vsyncpa [#allocation4], 0
    %8 = vsyncpa [#allocation7], 0
    %9 = vsyncpa [#allocation5], 0
    // Predicated region
    $region2: #{tpu_custom_call.1} parent=1 // pred_check
      _
    $region3: #{tpu_custom_call.1} parent=1 // pred_check_branch
      %11 = sbr.rel (0) target = $region5
    $region4: #{tpu_custom_call.1} parent=1 // pred_region
      %s13 = ssub.s32 256, 256
      %14 = vsyncadd [#allocation4], %s13
      %s15 = sshll.u32 [#allocation3], 4
      %s16 = int_to_ptr.vmem [resolvable:$true] %s15
      %21 = dma.hbm_to_vmem [thread:$0]  %s0, 256, %s16, [#allocation4], 128, 128, 8
    $region5: #{tpu_custom_call.1} parent=1 // pred_fallthru
      _
    // Predicated region
    $region6: #{tpu_custom_call.1} parent=1 // pred_check
      _
    $region7: #{tpu_custom_call.1} parent=1 // pred_check_branch
      %23 = sbr.rel (0) target = $region9
    $region8: #{tpu_custom_call.1} parent=1 // pred_region
      %s25 = ssub.s32 64, 64
      %26 = vsyncadd [#allocation7], %s25
      %s28 = sshll.u32 [#allocation6], 4
      %s29 = int_to_ptr.vmem [resolvable:$true] %s28
      %31 = dma.hbm_to_vmem [thread:$0]  %s1, 64, %s29, [#allocation7]
    $region9: #{tpu_custom_call.1} parent=1 // pred_fallthru
      _
    // Predicated region
    $region10: #{tpu_custom_call.1} parent=1 // pred_check
      _
    $region11: #{tpu_custom_call.1} parent=1 // pred_check_branch
      %33 = sbr.rel (0) target = $region13
    $region12: #{tpu_custom_call.1} parent=1 // pred_region
      %34 = dma.done [#allocation4], 256
    $region13: #{tpu_custom_call.1} parent=1 // pred_fallthru
      _
    // Predicated region
    $region14: #{tpu_custom_call.1} parent=1 // pred_check
      _
    $region15: #{tpu_custom_call.1} parent=1 // pred_check_branch
      %36 = sbr.rel (0) target = $region17
    $region16: #{tpu_custom_call.1} parent=1 // pred_region
      %37 = dma.done [#allocation7], 64
    $region17: #{tpu_custom_call.1} parent=1 // pred_fallthru
      _
    %p38 = scmp.eq.s32.totalorder 0, 0
    // Predicated region
    $region18: #{tpu_custom_call.1} parent=1 // pred_check
      %p39 = pneg %p38
    $region19: #{tpu_custom_call.1} parent=1 // pred_check_branch
      %41 = sbr.rel (%p39) target = $region21
    $region20: #{tpu_custom_call.1} parent=1 // pred_region
      %vm42 = vcmask 25600
      %43 = vst.msk [vmem:[#allocation2] sm:$0x3] %vm42, 0.0
    $region21: #{tpu_custom_call.1} parent=1 // pred_fallthru
      _
    %v44 = vld [vmem:[#allocation3] sm:$0xff]
    %v45 = vld [vmem:[#allocation3 + $0x8] sm:$0xff]
    %v46 = vld [vmem:[#allocation2] sm:$0x3]
    %v49 = vcombine.high %v44, %v44
    %v50 = vcombine.high %v45, %v45
    %vm53 = vcmask 1043456
    %v54 = vsel %vm53, %v44, 0.0
    %v55 = vsel %vm53, %v49, 0.0
    %v56 = vadd.f32 %v54, %v55
    %57 = vadd.xlane.f32.xlu0 %v56
    %v58 = vpop.xlane.xlu0 %57
    %v59 = vsel %vm53, %v45, 0.0
    %v60 = vsel %vm53, %v50, 0.0
    %v61 = vadd.f32 %v59, %v60
    %62 = vadd.xlane.f32.xlu0 %v61
    %v63 = vpop.xlane.xlu0 %62
    %v66 = vlaneseq
    %v67 = vand.u32 %v66, 127
    %v68 = vlaneseq
    %v69 = vshrl.u32 %v68, 7
    %v70 = vsub.s32 %v67, %v69
    %v71 = vrot.slane %v58, %v70
    %v72 = vlaneseq
    %v73 = vshrl.u32 %v72, 7
    %v74 = vsub.s32 %v67, %v73
    %v75 = vrot.slane %v63, %v74
    %vm76 = vcmask 1041409
    %v77 = vsel %vm76, %v75, %v71
    %v79 = vadd.f32 %v46, %v77
    %vm80 = vcmask 25600
    %81 = vst.msk [vmem:[#allocation2] sm:$0x3] %vm80, %v79
    // Predicated region
    $region22: #{tpu_custom_call.1} parent=1 // pred_check
      %p82 = pneg %p38
    $region23: #{tpu_custom_call.1} parent=1 // pred_check_branch
      %84 = sbr.rel (%p82) target = $region25
    $region24: #{tpu_custom_call.1} parent=1 // pred_region
      %v85 = vld [vmem:[#allocation2] sm:$0x3]
      %v86 = vmul.f32 %v85, %v85
      %v87 = vsel %vm80, %v86, 0.0
      %88 = vadd.xlane.f32.xlu0 %v87
      %v89 = vpop.xlane.xlu0 %88
      %v90 = vrsqrt.pop %v89
      %v91 = vmul.f32 %v85, %v90
      %v92 = vld [vmem:[#allocation6] sm:$0xf]
      %vm93 = vcmask 31744
      %v95 = vsel %vm93, %v91, 0
      %v98 = vsel %vm53, %v92, 0
      %100 = vmatprep.subr.mxu0 0.0
      %101 = vmatpush1.msra.mxu0 0.0
      %102 = vmatprep.subr.mxu0 0.0
      %103 = vmatpush1.msra.mxu0 0.0
      %104 = vmatprep.subr.mxu0 0.0
      %105 = vmatpush1.msra.mxu0 0.0
      %106 = vmatprep.subr.mxu0 0.0
      %107 = vmatpush1.msra.mxu0 0.0
      %108 = vmatprep.subr.mxu0 0.0
      %109 = vmatpush1.msra.mxu0 0.0
      %110 = vmatprep.subr.mxu0 0.0
      %111 = vmatpush1.msra.mxu0 0.0
      %112 = vmatprep.subr.mxu0 0.0
      %113 = vmatpush1.msra.mxu0 0.0
      %114 = vmatprep.subr.mxu0 0.0
      %115 = vmatpush1.msra.mxu0 0.0
      %116 = vmatprep.subr.mxu0 0.0
      %117 = vmatpush1.msra.mxu0 0.0
      %118 = vmatprep.subr.mxu0 0.0
      %119 = vmatpush1.msra.mxu0 0.0
      %120 = vmatprep.subr.mxu0 0.0
      %121 = vmatpush1.msra.mxu0 0.0
      %122 = vmatprep.subr.mxu0 0.0
      %123 = vmatpush1.msra.mxu0 0.0
      %124 = vmatprep.subr.mxu0 0.0
      %125 = vmatpush1.msra.mxu0 0.0
      %126 = vmatprep.subr.mxu0 0.0
      %127 = vmatpush1.msra.mxu0 0.0
      %128 = vmatprep.subr.mxu0 0.0
      %129 = vmatpush1.msra.mxu0 0.0
      %130 = vmatprep.subr.mxu0 0.0
      %131 = vmatpush1.msra.mxu0 %v98
      %132 = vmatprep.subr.mxu0 0.0
      %133 = vmatpush2.msra.mxu0 0.0
      %134 = vmatprep.subr.mxu0 0.0
      %135 = vmatpush2.msra.mxu0 0.0
      %136 = vmatprep.subr.mxu0 0.0
      %137 = vmatpush2.msra.mxu0 0.0
      %138 = vmatprep.subr.mxu0 0.0
      %139 = vmatpush2.msra.mxu0 0.0
      %140 = vmatprep.subr.mxu0 0.0
      %141 = vmatpush2.msra.mxu0 0.0
      %142 = vmatprep.subr.mxu0 0.0
      %143 = vmatpush2.msra.mxu0 0.0
      %144 = vmatprep.subr.mxu0 0.0
      %145 = vmatpush2.msra.mxu0 0.0
      %146 = vmatprep.subr.mxu0 0.0
      %147 = vmatpush2.msra.mxu0 0.0
      %148 = vmatprep.subr.mxu0 0.0
      %149 = vmatpush2.msra.mxu0 0.0
      %150 = vmatprep.subr.mxu0 0.0
      %151 = vmatpush2.msra.mxu0 0.0
      %152 = vmatprep.subr.mxu0 0.0
      %153 = vmatpush2.msra.mxu0 0.0
      %154 = vmatprep.subr.mxu0 0.0
      %155 = vmatpush2.msra.mxu0 0.0
      %156 = vmatprep.subr.mxu0 0.0
      %157 = vmatpush2.msra.mxu0 0.0
      %158 = vmatprep.subr.mxu0 0.0
      %159 = vmatpush2.msra.mxu0 0.0
      %160 = vmatprep.subr.mxu0 0.0
      %161 = vmatpush2.msra.mxu0 0.0
      %162 = vmatprep.subr.mxu0 0.0
      %163 = vmatpush2.msra.mxu0 0.0
      %164 = vmatprep.mubr.f32.mxu0 0.0
      %165 = vmatmul.mubr.f32.gmra.mxu0 %v95
      %v166 = vpop.f32.mrf.mxu0
      %v167 = vadd.f32 0.0, %v166
      %v168 = vpop.f32.mrf.mxu0
      %169 = vdwg.mxu0
      %v170 = vmul.f32 %v167, %v167
      %vm171 = vcmask 254976
      %v172 = vsel %vm171, %v170, 0.0
      %173 = vadd.xlane.f32.xlu0 %v172
      %v174 = vpop.xlane.xlu0 %173
      %v175 = vrsqrt.pop %v174
      %v176 = vmul.f32 %v167, %v175
      %177 = vst.msk [vmem:[#allocation8] sm:$0x3] %vm171, %v176
    $region25: #{tpu_custom_call.1} parent=1 // pred_fallthru
      _
    // Predicated region
    $region26: #{tpu_custom_call.1} parent=1 // pred_check
      _
    $region27: #{tpu_custom_call.1} parent=1 // pred_check_branch
      %179 = sbr.rel (0) target = $region29
    $region28: #{tpu_custom_call.1} parent=1 // pred_region
      %s181 = ssub.s32 32, 32
      %182 = vsyncadd [#allocation5], %s181
      %s184 = sshll.u32 [#allocation8], 4
      %s185 = int_to_ptr.vmem [resolvable:$true] %s184
      %187 = dma.vmem_to_hbm [thread:$0]  %s185, 32, %s2, [#allocation5]
    $region29: #{tpu_custom_call.1} parent=1 // pred_fallthru
      _
    // Predicated region
    $region30: #{tpu_custom_call.1} parent=1 // pred_check
      _
    $region31: #{tpu_custom_call.1} parent=1 // pred_check_branch
      %189 = sbr.rel (0) target = $region33
    $region32: #{tpu_custom_call.1} parent=1 // pred_region
      %190 = dma.done [#allocation5], 32
    $region33: #{tpu_custom_call.1} parent=1 // pred_fallthru
      _
    %191 = vsyncpa [#allocation4], 1
    %192 = vsyncpa [#allocation7], 1
    %193 = vsyncpa [#allocation5], 1

</llo_original>
